<compile_context>
chip_gen: v7x
topology: tpu7x:2x2x1
jax: 0.10.0
libtpu: 0.0.40
codegen_flags: <defaults>
</compile_context>

<pallas_src>
import jax
import jax.numpy as jnp
import numpy as np
from jax import lax
from jax.experimental import pallas as pl
from jax.experimental.pallas import tpu as pltpu


# ---------------------- fused patch-GEMM + bias kernel ----------------------
def _patch_gemm_kernel(p_ref, w_ref, b_ref, o_ref):
    # p_ref: (TM, K) bf16 patch tile (streamed), w_ref: (K, Cout) bf16
    # (resident), b_ref: (1, Cout) f32 (resident).  f32 MXU accumulation.
    acc = jnp.dot(p_ref[...], w_ref[...], preferred_element_type=jnp.float32)
    o_ref[...] = (acc + b_ref[...]).astype(o_ref.dtype)


def _round_up(a, m):
    return (a + m - 1) // m * m


# --------------------------------- wrapper ----------------------------------
def cube_embed_mul(x, weight, bias, *, kernel=(5, 5, 8), stride=(5, 5, 8),
                   padding=(0, 1, 1), tm=4096, channels_last=False,
                   out_dtype=jnp.float32):
    """Forward of CubeEmbed_mul: returns (conv3d(x), shape).

    Default output layout is NCDHW (matches nn.Conv3d).  channels_last=True
    returns (B, Do, Ho, Wo, Cout) and skips one output-sized HBM pass.
    """
    assert tuple(kernel) == tuple(stride), (
        "CubeEmbed uses kernel == stride (non-overlapping patches)")
    # TODO(synk): overlapping-window (kernel != stride) Conv3d not implemented.

    B, Cin, D, H, W = x.shape
    Cout = weight.shape[0]
    kD, kH, kW = kernel
    pD, pH, pW = padding

    Do = (D + 2 * pD - kD) // kD + 1
    Ho = (H + 2 * pH - kH) // kH + 1
    Wo = (W + 2 * pW - kW) // kW + 1
    K = Cin * kD * kH * kW
    M = B * Do * Ho * Wo
    # Note: K and Cout >= 128 keeps loads/stores lane-dense; smaller configs
    # still compile (full-dim blocks) but run with masked, narrow accesses.

    # Zero-pad spatial dims directly in bf16, crop to the full-window region.
    xp = jnp.pad(x.astype(jnp.bfloat16),
                 ((0, 0), (0, 0), (pD, pD), (pH, pH), (pW, pW)))
    xp = xp[:, :, :Do * kD, :Ho * kH, :Wo * kW]

    # im2col: (M, K), K ordered (Cin, kD, kH, kW) to match PyTorch's Conv3d
    # weight flattening.  With allow_input_fusion below, XLA may fuse this
    # producer into the pallas_call operand instead of writing it to HBM.
    patches = xp.reshape(B, Cin, Do, kD, Ho, kH, Wo, kW)
    patches = jnp.transpose(patches, (0, 2, 4, 6, 1, 3, 5, 7)).reshape(M, K)

    wk = jnp.reshape(weight, (Cout, K)).T.astype(jnp.bfloat16)    # (K, Cout)
    bk = jnp.reshape(bias, (1, Cout)).astype(jnp.float32)         # exact bias

    # Tile the token axis; K and Cout stay whole (weights resident in VMEM).
    if M <= tm:
        TM = _round_up(M, 8)
    else:
        TM = tm
    Mp = _round_up(M, TM)
    if Mp != M:
        patches = jnp.pad(patches, ((0, Mp - M), (0, 0)))

    in_bytes = 2                                   # bf16 operands
    out_bytes = jnp.dtype(out_dtype).itemsize
    cost = pl.CostEstimate(
        flops=2 * M * K * Cout,
        transcendentals=0,
        bytes_accessed=int(Mp * K * in_bytes + K * Cout * in_bytes
                           + Cout * 4 + Mp * Cout * out_bytes))

    out = pl.pallas_call(
        _patch_gemm_kernel,
        out_shape=jax.ShapeDtypeStruct((Mp, Cout), out_dtype),
        grid=(Mp // TM,),
        in_specs=[
            pl.BlockSpec((TM, K), lambda i: (i, 0)),     # streamed patch tile
            pl.BlockSpec((K, Cout), lambda i: (0, 0)),   # weight (resident)
            pl.BlockSpec((1, Cout), lambda i: (0, 0)),   # bias   (resident)
        ],
        out_specs=pl.BlockSpec((TM, Cout), lambda i: (i, 0)),
        compiler_params=pltpu.CompilerParams(
            dimension_semantics=("parallel",),           # v7x: 2 TCs share grid
            allow_input_fusion=[True, False, False],     # fuse im2col producer
            vmem_limit_bytes=48 * 1024 * 1024,           # > v5e 16MiB default,
        ),                                               # < v7x 64MiB physical
        cost_estimate=cost,
    )(patches, wk, bk)

    out = out[:M].reshape(B, Do, Ho, Wo, Cout)
    if not channels_last:
        # Matches nn.Conv3d NCDHW.  Perf-optimal consumers should pass
        # channels_last=True and take (B, Do, Ho, Wo, C) tokens directly.
        out = jnp.transpose(out, (0, 4, 1, 2, 3))
    return out, out.shape


# ----------------------------------- test ------------------------------------
if __name__ == "__main__":
    # Small shapes consistent with the module defaults:
    # dim_in=1, dim_out=200, kernel=stride=(5,5,8), padding=(0,1,1).
    B, Cin, D, H, W = 2, 1, 10, 8, 14
    Cout = 200
    kernel, stride, padding = (5, 5, 8), (5, 5, 8), (0, 1, 1)

    key = jax.random.PRNGKey(0)
    kx, kw, kb = jax.random.split(key, 3)
    x = jax.random.normal(kx, (B, Cin, D, H, W), jnp.float32)
    weight = 0.05 * jax.random.normal(kw, (Cout, Cin) + kernel, jnp.float32)
    bias = 0.05 * jax.random.normal(kb, (Cout,), jnp.float32)

    out, out_shape = cube_embed_mul(x, weight, bias, kernel=kernel,
                                    stride=stride, padding=padding)
    out = jax.block_until_ready(out)

    # Pure-JAX reference: Conv3d (NCDHW) on the same bf16-rounded operands the
    # kernel consumes (bf16 x bf16 -> f32 accumulation), so only reduction
    # order differs.
    x_bf = x.astype(jnp.bfloat16).astype(jnp.float32)
    w_bf = weight.astype(jnp.bfloat16).astype(jnp.float32)
    ref = lax.conv_general_dilated(
        x_bf, w_bf,
        window_strides=stride,
        padding=tuple((p, p) for p in padding),
        dimension_numbers=("NCDHW", "OIDHW", "NCDHW"),
    ) + bias.reshape(1, Cout, 1, 1, 1)
    ref = jax.block_until_ready(ref)

    assert out.shape == ref.shape == out_shape, (out.shape, ref.shape, out_shape)
    np.testing.assert_allclose(np.asarray(out), np.asarray(ref),
                               rtol=5e-3, atol=5e-3)

    print("KERNEL_OK")
</pallas_src>

<mosaic_0001>
module attributes {stable_mosaic.version = 11 : i64} {
  func.func @_patch_gemm_kernel(%arg0: i32, %arg1: memref<16x200xbf16, #tpu.memory_space<vmem>>, %arg2: memref<200x200xbf16, #tpu.memory_space<vmem>>, %arg3: memref<1x200xf32, #tpu.memory_space<vmem>>, %arg4: memref<16x200xf32, #tpu.memory_space<vmem>>) attributes {dimension_semantics = [#tpu.dimension_semantics<parallel>], iteration_bounds = array<i64: 1>, scalar_prefetch = 0 : i64, scratch_operands = 0 : i64, tpu.core_type = #tpu.core_type<tc>, window_params = [{transform_indices = @transform_0, window_bounds = array<i64: 16, 200>}, {pipeline_mode = #tpu.pipeline_mode<synchronous>, transform_indices = @transform_1, window_bounds = array<i64: 200, 200>}, {pipeline_mode = #tpu.pipeline_mode<synchronous>, transform_indices = @transform_2, window_bounds = array<i64: 1, 200>}, {transform_indices = @transform_3, window_bounds = array<i64: 16, 200>}]} {
    %c0 = arith.constant 0 : index
    %c0_0 = arith.constant 0 : index
    %0 = vector.load %arg1[%c0, %c0_0] : memref<16x200xbf16, #tpu.memory_space<vmem>>, vector<16x200xbf16>
    %c0_1 = arith.constant 0 : index
    %c0_2 = arith.constant 0 : index
    %1 = vector.load %arg2[%c0_1, %c0_2] : memref<200x200xbf16, #tpu.memory_space<vmem>>, vector<200x200xbf16>
    %cst = arith.constant dense<0.000000e+00> : vector<16x200xf32>
    %2 = tpu.matmul %0, %1, %cst {dimension_numbers = #tpu.dot_dimension_numbers<[1], [0], [0], [1], [0, 0, 1, 1], [], []>} : vector<16x200xbf16>, vector<200x200xbf16>, vector<16x200xf32> -> vector<16x200xf32>
    %c0_3 = arith.constant 0 : index
    %c0_4 = arith.constant 0 : index
    %3 = vector.load %arg3[%c0_3, %c0_4] : memref<1x200xf32, #tpu.memory_space<vmem>>, vector<1x200xf32>
    %4 = vector.broadcast %3 : vector<1x200xf32> to vector<16x200xf32>
    %5 = arith.addf %2, %4 : vector<16x200xf32>
    %c0_5 = arith.constant 0 : index
    %c0_6 = arith.constant 0 : index
    %6 = vector.load %arg4[%c0_5, %c0_6] : memref<16x200xf32, #tpu.memory_space<vmem>>, vector<16x200xf32>
    tpu.vector_store %arg4[%c0_5, %c0_6], %5 {strides = array<i32>} : memref<16x200xf32, #tpu.memory_space<vmem>>, vector<16x200xf32>,
    return
  }
  func.func @transform_0(%arg0: i32) -> (i32, i32) {
    %c0_i32 = arith.constant 0 : i32
    %c0_i32_0 = arith.constant 0 : i32
    return %arg0, %c0_i32 : i32, i32
  }
  func.func @transform_1(%arg0: i32) -> (i32, i32) {
    %c0_i32 = arith.constant 0 : i32
    %c0_i32_0 = arith.constant 0 : i32
    %c0_i32_1 = arith.constant 0 : i32
    return %c0_i32, %c0_i32_0 : i32, i32
  }
  func.func @transform_2(%arg0: i32) -> (i32, i32) {
    %c0_i32 = arith.constant 0 : i32
    %c0_i32_0 = arith.constant 0 : i32
    %c0_i32_1 = arith.constant 0 : i32
    return %c0_i32, %c0_i32_0 : i32, i32
  }
  func.func @transform_3(%arg0: i32) -> (i32, i32) {
    %c0_i32 = arith.constant 0 : i32
    %c0_i32_0 = arith.constant 0 : i32
    return %arg0, %c0_i32 : i32, i32
  }
}

</mosaic_0001>

<llo_original>
// kernel: tpu_custom_call.1
$region0: #{tpu_custom_call.1}
  #allocation0 [shape = 'u32[]', space=smem, size = 0x4, offset = 0x4, fixed_abs, tag = 'smem constant byte address 0x4 - core index']
  #allocation1 [shape = 'u32[144,128]{1,0:T(1,128)}', space=vmem, size = 0x12000, scoped, tag = 'internal scratch']
  %s0 = inlined_call_operand.hbm [shape: bf16[16,200], index: 0, kind: input, shape index: {}]
  %s1 = inlined_call_operand.hbm [shape: bf16[200,200], index: 1, kind: input, shape index: {}]
  %s2 = inlined_call_operand.vmem [shape: f32[1,200], index: 2, kind: input, shape index: {}]
  %s3 = inlined_call_operand.hbm [shape: f32[16,200], index: 3, kind: output, shape index: {}]
  %s4 = sld [smem:[#allocation0]]
  $region30: #{tpu_custom_call.1} parent=0
    _
  %s6 = ssub.s32 1, %s4
  %s7 = scalar_select 0, %s6, %s4
  $region1: #{tpu_custom_call.1} parent=0
    #allocation2 [shape = 'u8[8192]{0}', space=vmem, size = 0x2000, scoped, tag = 'input window, operand 0, single buffered']
    #allocation3 [shape = 's32[1]{0}', space=sflag, size = 0x4, scoped, tag = 'scoped memory for tpu_custom_call.1']
    #allocation4 [shape = 's32[1]{0}', space=sflag, size = 0x4, scoped, tag = 'scoped memory for tpu_custom_call.1']
    #allocation5 [shape = 'u8[102400]{0}', space=vmem, size = 0x19000, scoped, tag = 'input window, operand 1, single buffered']
    #allocation6 [shape = 's32[1]{0}', space=sflag, size = 0x4, scoped, tag = 'scoped memory for tpu_custom_call.1']
    #allocation7 [shape = 'u8[16384]{0}', space=vmem, size = 0x4000, scoped, tag = 'output window, operand 0, single buffered']
    %8 = vsyncpa [#allocation3], 0
    %9 = vsyncpa [#allocation6], 0
    %10 = vsyncpa [#allocation4], 0
    // Predicated region
    $region2: #{tpu_custom_call.1} parent=1 // pred_check
      _
    $region3: #{tpu_custom_call.1} parent=1 // pred_check_branch
      %12 = sbr.rel (0) target = $region5
    $region4: #{tpu_custom_call.1} parent=1 // pred_region
      %s14 = ssub.s32 256, 256
      %15 = vsyncadd [#allocation3], %s14
      %s16 = sshll.u32 [#allocation2], 4
      %s17 = int_to_ptr.vmem [resolvable:$true] %s16
      %22 = dma.hbm_to_vmem [thread:$0]  %s0, 256, %s17, [#allocation3], 128, 128, 8
    $region5: #{tpu_custom_call.1} parent=1 // pred_fallthru
      _
    // Predicated region
    $region6: #{tpu_custom_call.1} parent=1 // pred_check
      _
    $region7: #{tpu_custom_call.1} parent=1 // pred_check_branch
      %24 = sbr.rel (0) target = $region9
    $region8: #{tpu_custom_call.1} parent=1 // pred_region
      %s26 = ssub.s32 3200, 3200
      %27 = vsyncadd [#allocation6], %s26
      %s28 = sshll.u32 [#allocation5], 4
      %s29 = int_to_ptr.vmem [resolvable:$true] %s28
      %34 = dma.hbm_to_vmem [thread:$0]  %s1, 3200, %s29, [#allocation6], 128, 128, 8
    $region9: #{tpu_custom_call.1} parent=1 // pred_fallthru
      _
    // Predicated region
    $region10: #{tpu_custom_call.1} parent=1 // pred_check
      _
    $region11: #{tpu_custom_call.1} parent=1 // pred_check_branch
      %36 = sbr.rel (0) target = $region13
    $region12: #{tpu_custom_call.1} parent=1 // pred_region
      _
    $region13: #{tpu_custom_call.1} parent=1 // pred_fallthru
      _
    // Predicated region
    $region14: #{tpu_custom_call.1} parent=1 // pred_check
      _
    $region15: #{tpu_custom_call.1} parent=1 // pred_check_branch
      %38 = sbr.rel (0) target = $region17
    $region16: #{tpu_custom_call.1} parent=1 // pred_region
      %39 = dma.done [#allocation3], 256
    $region17: #{tpu_custom_call.1} parent=1 // pred_fallthru
      _
    // Predicated region
    $region18: #{tpu_custom_call.1} parent=1 // pred_check
      _
    $region19: #{tpu_custom_call.1} parent=1 // pred_check_branch
      %41 = sbr.rel (0) target = $region21
    $region20: #{tpu_custom_call.1} parent=1 // pred_region
      %42 = dma.done [#allocation6], 3200
    $region21: #{tpu_custom_call.1} parent=1 // pred_fallthru
      _
    %v44 = vld [vmem:[#allocation2] sm:$0xff]
    %v45 = vld [vmem:[#allocation2 + $0x8] sm:$0xff]
    %v46 = vld [vmem:[#allocation5] sm:$0xff]
    %v47 = vld [vmem:[#allocation5 + $0x8] sm:$0xff]
    %v48 = vld [vmem:[#allocation5 + $0x10] sm:$0xff]
    %v49 = vld [vmem:[#allocation5 + $0x18] sm:$0xff]
    %v50 = vld [vmem:[#allocation5 + $0x20] sm:$0xff]
    %v51 = vld [vmem:[#allocation5 + $0x28] sm:$0xff]
    %v52 = vld [vmem:[#allocation5 + $0x30] sm:$0xff]
    %v53 = vld [vmem:[#allocation5 + $0x38] sm:$0xff]
    %v54 = vld [vmem:[#allocation5 + $0x40] sm:$0xff]
    %v55 = vld [vmem:[#allocation5 + $0x48] sm:$0xff]
    %v56 = vld [vmem:[#allocation5 + $0x50] sm:$0xff]
    %v57 = vld [vmem:[#allocation5 + $0x58] sm:$0xff]
    %v58 = vld [vmem:[#allocation5 + $0x60] sm:$0xff]
    %v59 = vld [vmem:[#allocation5 + $0x68] sm:$0xff]
    %v60 = vld [vmem:[#allocation5 + $0x70] sm:$0xff]
    %v61 = vld [vmem:[#allocation5 + $0x78] sm:$0xff]
    %v62 = vld [vmem:[#allocation5 + $0x80] sm:$0xff]
    %v63 = vld [vmem:[#allocation5 + $0x88] sm:$0xff]
    %v64 = vld [vmem:[#allocation5 + $0x90] sm:$0xff]
    %v65 = vld [vmem:[#allocation5 + $0x98] sm:$0xff]
    %v66 = vld [vmem:[#allocation5 + $0xa0] sm:$0xff]
    %v67 = vld [vmem:[#allocation5 + $0xa8] sm:$0xff]
    %v68 = vld [vmem:[#allocation5 + $0xb0] sm:$0xff]
    %v69 = vld [vmem:[#allocation5 + $0xb8] sm:$0xff]
    %v70 = vld [vmem:[#allocation5 + $0xc0] sm:$0xff]
    %v71 = vld [vmem:[%s2] sm:$0x3]
    %v73 = vlaneseq
    %v74 = vshrl.u32 %v73, 7
    %v75 = vsub.s32 0, %v74
    %v76 = vrot.slane %v71, %v75
    %v77 = vlaneseq
    %v78 = vshrl.u32 %v77, 7
    %v79 = vsub.s32 1, %v78
    %v80 = vrot.slane %v71, %v79
    %v85 = vunpack.c.l.b16 %v44
    %v86 = vunpack.c.h.b16 %v44
    %v87 = vunpack.c.l.b16 %v45
    %v88 = vunpack.c.h.b16 %v45
    %v89 = vpack.c.b16 %v87, %v85
    %v90 = vpack.c.b16 %v88, %v86
    %v117 = vunpack.c.l.b16 %v46
    %v118 = vunpack.c.h.b16 %v46
    %v119 = vunpack.c.l.b16 %v47
    %v120 = vunpack.c.h.b16 %v47
    %v121 = vunpack.c.l.b16 %v48
    %v122 = vunpack.c.h.b16 %v48
    %v123 = vunpack.c.l.b16 %v49
    %v124 = vunpack.c.h.b16 %v49
    %v125 = vunpack.c.l.b16 %v50
    %v126 = vunpack.c.h.b16 %v50
    %v127 = vunpack.c.l.b16 %v51
    %v128 = vunpack.c.h.b16 %v51
    %v129 = vunpack.c.l.b16 %v52
    %v130 = vunpack.c.h.b16 %v52
    %v131 = vunpack.c.l.b16 %v53
    %v132 = vunpack.c.h.b16 %v53
    %v133 = vunpack.c.l.b16 %v54
    %v134 = vunpack.c.h.b16 %v54
    %v135 = vunpack.c.l.b16 %v55
    %v136 = vunpack.c.h.b16 %v55
    %v137 = vunpack.c.l.b16 %v56
    %v138 = vunpack.c.h.b16 %v56
    %v139 = vunpack.c.l.b16 %v57
    %v140 = vunpack.c.h.b16 %v57
    %v141 = vunpack.c.l.b16 %v58
    %v142 = vunpack.c.h.b16 %v58
    %v143 = vunpack.c.l.b16 %v59
    %v144 = vunpack.c.h.b16 %v59
    %v145 = vunpack.c.l.b16 %v60
    %v146 = vunpack.c.h.b16 %v60
    %v147 = vunpack.c.l.b16 %v61
    %v148 = vunpack.c.h.b16 %v61
    %v149 = vunpack.c.l.b16 %v62
    %v150 = vunpack.c.h.b16 %v62
    %v151 = vunpack.c.l.b16 %v63
    %v152 = vunpack.c.h.b16 %v63
    %v153 = vunpack.c.l.b16 %v64
    %v154 = vunpack.c.h.b16 %v64
    %v155 = vunpack.c.l.b16 %v65
    %v156 = vunpack.c.h.b16 %v65
    %v157 = vunpack.c.l.b16 %v66
    %v158 = vunpack.c.h.b16 %v66
    %v159 = vunpack.c.l.b16 %v67
    %v160 = vunpack.c.h.b16 %v67
    %v161 = vunpack.c.l.b16 %v68
    %v162 = vunpack.c.h.b16 %v68
    %v163 = vunpack.c.l.b16 %v69
    %v164 = vunpack.c.h.b16 %v69
    %v165 = vunpack.c.l.b16 %v70
    %v166 = vunpack.c.h.b16 %v70
    %v167 = vpack.c.b16 %v119, %v117
    %v168 = vpack.c.b16 %v120, %v118
    %v169 = vpack.c.b16 %v123, %v121
    %v170 = vpack.c.b16 %v124, %v122
    %v171 = vpack.c.b16 %v127, %v125
    %v172 = vpack.c.b16 %v128, %v126
    %v173 = vpack.c.b16 %v131, %v129
    %v174 = vpack.c.b16 %v132, %v130
    %v175 = vpack.c.b16 %v135, %v133
    %v176 = vpack.c.b16 %v136, %v134
    %v177 = vpack.c.b16 %v139, %v137
    %v178 = vpack.c.b16 %v140, %v138
    %v179 = vpack.c.b16 %v143, %v141
    %v180 = vpack.c.b16 %v144, %v142
    %v181 = vpack.c.b16 %v147, %v145
    %v182 = vpack.c.b16 %v148, %v146
    %v183 = vpack.c.b16 %v151, %v149
    %v184 = vpack.c.b16 %v152, %v150
    %v185 = vpack.c.b16 %v155, %v153
    %v186 = vpack.c.b16 %v156, %v154
    %v187 = vpack.c.b16 %v159, %v157
    %v188 = vpack.c.b16 %v160, %v158
    %v189 = vpack.c.b16 %v163, %v161
    %v190 = vpack.c.b16 %v164, %v162
    %v191 = vpack.c.b16 %v165, %v165
    %v192 = vpack.c.b16 %v166, %v166
    %vm217 = vcmask 588800
    %v219 = vsel %vm217, %v90, 0
    %vm221 = vcmask 1043456
    %v223 = vsel %vm221, %v191, 0
    %v226 = vsel %vm221, %v192, 0
    %228 = vmatprep.subr.bf16.mxu0 %v168
    %229 = vmatpush1.bf16.msra.mxu0 %v167
    %230 = vmatprep.subr.bf16.mxu0 %v170
    %231 = vmatpush1.bf16.msra.mxu0 %v169
    %232 = vmatprep.subr.bf16.mxu0 %v172
    %233 = vmatpush1.bf16.msra.mxu0 %v171
    %234 = vmatprep.subr.bf16.mxu0 %v174
    %235 = vmatpush1.bf16.msra.mxu0 %v173
    %236 = vmatprep.subr.bf16.mxu0 %v176
    %237 = vmatpush1.bf16.msra.mxu0 %v175
    %238 = vmatprep.subr.bf16.mxu0 %v178
    %239 = vmatpush1.bf16.msra.mxu0 %v177
    %240 = vmatprep.subr.bf16.mxu0 %v180
    %241 = vmatpush1.bf16.msra.mxu0 %v179
    %242 = vmatprep.subr.bf16.mxu0 %v182
    %243 = vmatpush1.bf16.msra.mxu0 %v181
    %244 = vmatprep.subr.bf16.mxu0 %v184
    %245 = vmatpush1.bf16.msra.mxu0 %v183
    %246 = vmatprep.subr.bf16.mxu0 %v186
    %247 = vmatpush1.bf16.msra.mxu0 %v185
    %248 = vmatprep.subr.bf16.mxu0 %v188
    %249 = vmatpush1.bf16.msra.mxu0 %v187
    %250 = vmatprep.subr.bf16.mxu0 %v190
    %251 = vmatpush1.bf16.msra.mxu0 %v189
    %252 = vmatprep.subr.bf16.mxu0 %v226
    %253 = vmatpush1.bf16.msra.mxu0 %v223
    %254 = vmatprep.subr.bf16.mxu0 0
    %255 = vmatpush1.bf16.msra.mxu0 0
    %256 = vmatprep.subr.bf16.mxu0 0
    %257 = vmatpush1.bf16.msra.mxu0 0
    %258 = vmatprep.subr.bf16.mxu0 0
    %259 = vmatpush1.bf16.msra.mxu0 0
    %260 = vmatprep.mubr.bf16.mxu0 %v219
    %261 = vmatmul.mubr.bf16.gmra.mrb[0].mxu0 %v89
    %v262 = vpop.f32.mrb[0].mxu0
    %v263 = vadd.f32 %v76, %v262
    %v264 = vpop.f32.mrb[0].mxu0
    %v265 = vadd.f32 %v80, %v264
    %v266 = vpop.f32.mrb[0].mxu0
    %v267 = vadd.f32 %v76, %v266
    %v268 = vpop.f32.mrb[0].mxu0
    %v269 = vadd.f32 %v80, %v268
    %270 = vdwg.mxu0
    %271 = vst [vmem:[#allocation7] sm:$0xff] %v263
    %272 = vst.msk [vmem:[#allocation7 + $0x8] sm:$0xff] %vm217, %v265
    %273 = vst [vmem:[#allocation7 + $0x10] sm:$0xff] %v267
    %274 = vst.msk [vmem:[#allocation7 + $0x18] sm:$0xff] %vm217, %v269
    // Predicated region
    $region22: #{tpu_custom_call.1} parent=1 // pred_check
      _
    $region23: #{tpu_custom_call.1} parent=1 // pred_check_branch
      %276 = sbr.rel (0) target = $region25
    $region24: #{tpu_custom_call.1} parent=1 // pred_region
      %s278 = ssub.s32 512, 512
      %279 = vsyncadd [#allocation4], %s278
      %s280 = sshll.u32 [#allocation7], 4
      %s281 = int_to_ptr.vmem [resolvable:$true] %s280
      %286 = dma.vmem_to_hbm [thread:$0]  %s281, 512, %s3, [#allocation4], 256, 256, 16
    $region25: #{tpu_custom_call.1} parent=1 // pred_fallthru
      _
    // Predicated region
    $region26: #{tpu_custom_call.1} parent=1 // pred_check
      _
    $region27: #{tpu_custom_call.1} parent=1 // pred_check_branch
      %288 = sbr.rel (0) target = $region29
    $region28: #{tpu_custom_call.1} parent=1 // pred_region
      %289 = dma.done [#allocation4], 512
    $region29: #{tpu_custom_call.1} parent=1 // pred_fallthru
      _
    %290 = vsyncpa [#allocation3], 1
    %291 = vsyncpa [#allocation6], 1
    %292 = vsyncpa [#allocation4], 1

</llo_original>
